<compile_context>
chip_gen: v7x
topology: tpu7x:2x2x1
jax: 0.10.0
libtpu: 0.0.40
codegen_flags: <defaults>
</compile_context>

<pallas_src>
import jax
import jax.numpy as jnp
from jax.experimental import pallas as pl
from jax.experimental.pallas import tpu as pltpu

LANES = 128
DEFAULT_BLOCK_ROWS = 1024   # 1024 * 128 * 4B = 512 KiB per input block
NUM_PARTS = 2               # megacore split for v7x; no-op on 1-TC chips


def _round_up(x: int, m: int) -> int:
    return ((x + m - 1) // m) * m


def _make_loss_kernel(range_up: float, rows: int, block_rows: int,
                      blocks_per_part: int):
    range_up = float(range_up)

    def kernel(pred_ref, gt_ref, out_ref, acc_sum, acc_cnt):
        c = pl.program_id(0)   # parallel chunk (per TensorCore on v7x)
        k = pl.program_id(1)   # sequential block within the chunk

        @pl.when(k == 0)
        def _():
            acc_sum[...] = jnp.zeros_like(acc_sum)
            acc_cnt[...] = jnp.zeros_like(acc_cnt)

        # Cast in VMEM (free VPU work under the DMA) instead of in the wrapper.
        gt = gt_ref[...].astype(jnp.float32)
        pred = pred_ref[...].astype(jnp.float32)

        # Row-validity mask: handles partial boundary blocks and chunks whose
        # intended block index falls past the array (clamped in the index_map).
        intended_block = c * blocks_per_part + k
        row_in_block = jax.lax.broadcasted_iota(
            jnp.int32, (block_rows, LANES), 0)
        global_row = intended_block * block_rows + row_in_block
        row_valid = global_row < rows

        mask = (gt > 0.0) & (gt < jnp.float32(range_up)) & row_valid
        diff = jnp.where(mask, jnp.abs(pred - gt), 0.0)

        # Elementwise accumulation (VPU); no per-step cross-lane reduce.
        acc_sum[...] += diff
        acc_cnt[...] += mask.astype(jnp.float32)

        # Single cross-lane reduction + SMEM store on the last step.
        @pl.when(k == pl.num_programs(1) - 1)
        def _():
            out_ref[0, 0] = jnp.sum(acc_sum[...])
            out_ref[0, 1] = jnp.sum(acc_cnt[...])

    return kernel


def loss_l1(pred: jax.Array, gt: jax.Array, range_up: float = 1.0,
            block_rows: int = DEFAULT_BLOCK_ROWS) -> jax.Array:
    """Masked L1 mean matching LossL1.forward for NCHW float inputs."""
    assert pred.shape == gt.shape
    total = pred.size

    # Flatten (free).  Only pad when the flat size is not lane-aligned; the
    # pad is at most 127 elements and padded gt == 0 is out-of-range, so it
    # contributes nothing to sum or count.
    pred_flat = pred.reshape(-1)
    gt_flat = gt.reshape(-1)
    if total % LANES != 0:
        pad = LANES - total % LANES
        pred_flat = jnp.pad(pred_flat, (0, pad))
        gt_flat = jnp.pad(gt_flat, (0, pad))

    rows = pred_flat.size // LANES
    pred2d = pred_flat.reshape(rows, LANES)
    gt2d = gt_flat.reshape(rows, LANES)

    block_rows = min(block_rows, _round_up(rows, 8))
    total_blocks = pl.cdiv(rows, block_rows)
    num_parts = min(NUM_PARTS, total_blocks)
    blocks_per_part = pl.cdiv(total_blocks, num_parts)

    if total_blocks % num_parts == 0:
        def in_map(c, k):
            return (c * blocks_per_part + k, 0)
    else:
        # Uneven split: clamp the block index; the in-kernel row mask zeroes
        # out any contribution from the re-read block.
        def in_map(c, k):
            return (jnp.minimum(c * blocks_per_part + k, total_blocks - 1), 0)

    partials = pl.pallas_call(
        _make_loss_kernel(range_up, rows, block_rows, blocks_per_part),
        out_shape=jax.ShapeDtypeStruct((num_parts, 2), jnp.float32),
        grid_spec=pltpu.PrefetchScalarGridSpec(
            num_scalar_prefetch=0,
            grid=(num_parts, blocks_per_part),
            in_specs=[
                pl.BlockSpec((block_rows, LANES), in_map),
                pl.BlockSpec((block_rows, LANES), in_map),
            ],
            out_specs=pl.BlockSpec((1, 2), lambda c, k: (c, 0),
                                   memory_space=pltpu.SMEM),
            scratch_shapes=[
                pltpu.VMEM((block_rows, LANES), jnp.float32),
                pltpu.VMEM((block_rows, LANES), jnp.float32),
            ],
        ),
        compiler_params=pltpu.CompilerParams(
            dimension_semantics=("parallel", "arbitrary")),
    )(pred2d, gt2d)

    total_sum = jnp.sum(partials[:, 0])
    total_cnt = jnp.sum(partials[:, 1])
    # NOTE: if no element satisfies 0 < gt < range_up this is 0/0 -> NaN,
    # identical to the PyTorch reference behaviour.
    return (total_sum / total_cnt).astype(jnp.float32)


def _reference(pred, gt, range_up=1.0):
    mask = (gt > 0.0) & (gt < range_up)
    l1 = jnp.where(mask, jnp.abs(pred - gt), 0.0)
    return jnp.sum(l1) / jnp.sum(mask.astype(jnp.float32))


if __name__ == "__main__":
    key = jax.random.PRNGKey(0)

    def make_inputs(shape, key):
        k1, k2 = jax.random.split(key)
        gt = jax.random.uniform(k1, shape, jnp.float32, minval=-0.5, maxval=1.5)
        pred = jax.random.uniform(k2, shape, jnp.float32, minval=0.0, maxval=1.0)
        return pred, gt

    # Primary test: NCHW input like the PyTorch module expects.
    k0, k1, k2 = jax.random.split(key, 3)
    pred, gt = make_inputs((2, 4, 16, 16), k0)
    out = jax.block_until_ready(loss_l1(pred, gt, range_up=1.0))
    ref = _reference(pred, gt, range_up=1.0)
    assert jnp.allclose(out, ref, rtol=1e-5, atol=1e-6), (out, ref)

    # Secondary check: ragged size (not lane-aligned) -> tail pad + in-kernel
    # row mask for the partial boundary block.
    pred_b, gt_b = make_inputs((2, 3, 10, 10), k1)
    out_b = jax.block_until_ready(loss_l1(pred_b, gt_b, range_up=1.0))
    ref_b = _reference(pred_b, gt_b, range_up=1.0)
    assert jnp.allclose(out_b, ref_b, rtol=1e-5, atol=1e-6), (out_b, ref_b)

    # Secondary check: tiny block_rows forces a multi-block grid with an
    # uneven 2-way parallel split (clamped index_map path).
    pred_c, gt_c = make_inputs((2, 5, 16, 16), k2)
    out_c = jax.block_until_ready(loss_l1(pred_c, gt_c, range_up=1.0,
                                          block_rows=8))
    ref_c = _reference(pred_c, gt_c, range_up=1.0)
    assert jnp.allclose(out_c, ref_c, rtol=1e-5, atol=1e-6), (out_c, ref_c)

    print("KERNEL_OK")
</pallas_src>

<mosaic_0001>
module attributes {stable_mosaic.version = 11 : i64} {
  func.func @kernel(%arg0: i32, %arg1: i32, %arg2: memref<16x128xf32, #tpu.memory_space<vmem>>, %arg3: memref<16x128xf32, #tpu.memory_space<vmem>>, %arg4: memref<1x2xf32, #tpu.memory_space<smem>>, %arg5: memref<16x128xf32, #tpu.memory_space<vmem>>, %arg6: memref<16x128xf32, #tpu.memory_space<vmem>>) attributes {dimension_semantics = [#tpu.dimension_semantics<parallel>, #tpu.dimension_semantics<arbitrary>], iteration_bounds = array<i64: 1, 1>, scalar_prefetch = 0 : i64, scratch_operands = 2 : i64, tpu.core_type = #tpu.core_type<tc>, window_params = [{transform_indices = @transform_0, window_bounds = array<i64: 16, 128>}, {transform_indices = @transform_1, window_bounds = array<i64: 16, 128>}, {transform_indices = @transform_2, window_bounds = array<i64: 1, 2>}]} {
    %c0_i32 = arith.constant 0 : i32
    %0 = arith.cmpi eq, %arg1, %c0_i32 : i32
    %1 = arith.extui %0 : i1 to i32
    %c0_i32_0 = arith.constant 0 : i32
    %2 = arith.cmpi ne, %1, %c0_i32_0 : i32
    scf.if %2 {
      %cst_17 = arith.constant 0.000000e+00 : f32
      %34 = vector.broadcast %cst_17 : f32 to vector<16x128xf32>
      %c0_18 = arith.constant 0 : index
      %c0_19 = arith.constant 0 : index
      %35 = vector.load %arg5[%c0_18, %c0_19] : memref<16x128xf32, #tpu.memory_space<vmem>>, vector<16x128xf32>
      tpu.vector_store %arg5[%c0_18, %c0_19], %34 {strides = array<i32>} : memref<16x128xf32, #tpu.memory_space<vmem>>, vector<16x128xf32>,
      %cst_20 = arith.constant 0.000000e+00 : f32
      %36 = vector.broadcast %cst_20 : f32 to vector<16x128xf32>
      %c0_21 = arith.constant 0 : index
      %c0_22 = arith.constant 0 : index
      %37 = vector.load %arg6[%c0_21, %c0_22] : memref<16x128xf32, #tpu.memory_space<vmem>>, vector<16x128xf32>
      tpu.vector_store %arg6[%c0_21, %c0_22], %36 {strides = array<i32>} : memref<16x128xf32, #tpu.memory_space<vmem>>, vector<16x128xf32>,
    } else {
    }
    %c0 = arith.constant 0 : index
    %c0_1 = arith.constant 0 : index
    %3 = vector.load %arg3[%c0, %c0_1] : memref<16x128xf32, #tpu.memory_space<vmem>>, vector<16x128xf32>
    %c0_2 = arith.constant 0 : index
    %c0_3 = arith.constant 0 : index
    %4 = vector.load %arg2[%c0_2, %c0_3] : memref<16x128xf32, #tpu.memory_space<vmem>>, vector<16x128xf32>
    %c1_i32 = arith.constant 1 : i32
    %5 = arith.muli %arg0, %c1_i32 : i32
    %6 = arith.addi %5, %arg1 : i32
    %7 = tpu.iota {dimensions = array<i32: 0>} : vector<16x128xi32>
    %c16_i32 = arith.constant 16 : i32
    %8 = arith.muli %6, %c16_i32 : i32
    %9 = vector.broadcast %8 : i32 to vector<16x128xi32>
    %10 = arith.addi %9, %7 : vector<16x128xi32>
    %c16_i32_4 = arith.constant 16 : i32
    %11 = vector.broadcast %c16_i32_4 : i32 to vector<16x128xi32>
    %12 = arith.cmpi slt, %10, %11 : vector<16x128xi32>
    %cst = arith.constant 0.000000e+00 : f32
    %13 = vector.broadcast %cst : f32 to vector<16x128xf32>
    %14 = arith.cmpf ogt, %3, %13 : vector<16x128xf32>
    %cst_5 = arith.constant 1.000000e+00 : f32
    %15 = vector.broadcast %cst_5 : f32 to vector<16x128xf32>
    %16 = arith.cmpf olt, %3, %15 : vector<16x128xf32>
    %17 = arith.andi %14, %16 : vector<16x128xi1>
    %18 = arith.andi %17, %12 : vector<16x128xi1>
    %19 = arith.subf %4, %3 : vector<16x128xf32>
    %20 = math.absf %19 : vector<16x128xf32>
    %cst_6 = arith.constant 0.000000e+00 : f32
    %21 = vector.broadcast %cst_6 : f32 to vector<16x128xf32>
    %22 = arith.select %18, %20, %21 : vector<16x128xi1>, vector<16x128xf32>
    %c0_7 = arith.constant 0 : index
    %c0_8 = arith.constant 0 : index
    %23 = vector.load %arg5[%c0_7, %c0_8] : memref<16x128xf32, #tpu.memory_space<vmem>>, vector<16x128xf32>
    %24 = arith.addf %23, %22 : vector<16x128xf32>
    %c0_9 = arith.constant 0 : index
    %c0_10 = arith.constant 0 : index
    %25 = vector.load %arg5[%c0_9, %c0_10] : memref<16x128xf32, #tpu.memory_space<vmem>>, vector<16x128xf32>
    tpu.vector_store %arg5[%c0_9, %c0_10], %24 {strides = array<i32>} : memref<16x128xf32, #tpu.memory_space<vmem>>, vector<16x128xf32>,
    %c0_11 = arith.constant 0 : index
    %c0_12 = arith.constant 0 : index
    %26 = vector.load %arg6[%c0_11, %c0_12] : memref<16x128xf32, #tpu.memory_space<vmem>>, vector<16x128xf32>
    %27 = arith.extui %18 : vector<16x128xi1> to vector<16x128xi32>
    %28 = arith.sitofp %27 : vector<16x128xi32> to vector<16x128xf32>
    %29 = arith.addf %26, %28 : vector<16x128xf32>
    %c0_13 = arith.constant 0 : index
    %c0_14 = arith.constant 0 : index
    %30 = vector.load %arg6[%c0_13, %c0_14] : memref<16x128xf32, #tpu.memory_space<vmem>>, vector<16x128xf32>
    tpu.vector_store %arg6[%c0_13, %c0_14], %29 {strides = array<i32>} : memref<16x128xf32, #tpu.memory_space<vmem>>, vector<16x128xf32>,
    %c0_i32_15 = arith.constant 0 : i32
    %31 = arith.cmpi eq, %arg1, %c0_i32_15 : i32
    %32 = arith.extui %31 : i1 to i32
    %c0_i32_16 = arith.constant 0 : i32
    %33 = arith.cmpi ne, %32, %c0_i32_16 : i32
    scf.if %33 {
      %c0_17 = arith.constant 0 : index
      %c0_18 = arith.constant 0 : index
      %34 = vector.load %arg5[%c0_17, %c0_18] : memref<16x128xf32, #tpu.memory_space<vmem>>, vector<16x128xf32>
      %35 = vector.shape_cast %34 : vector<16x128xf32> to vector<1x16x128xf32>
      %cst_19 = arith.constant dense<0.000000e+00> : vector<1xf32>
      %36 = vector.multi_reduction <add>, %35, %cst_19 [1, 2] : vector<1x16x128xf32> to vector<1xf32>
      %37 = vector.shape_cast %36 : vector<1xf32> to vector<1x1x1xf32>
      %38 = vector.extract %37[0, 0, 0] : f32 from vector<1x1x1xf32>
      %c0_20 = arith.constant 0 : index
      %c0_21 = arith.constant 0 : index
      %39 = memref.load %arg4[%c0_20, %c0_21] : memref<1x2xf32, #tpu.memory_space<smem>>
      memref.store %38, %arg4[%c0_20, %c0_21] : memref<1x2xf32, #tpu.memory_space<smem>>
      %c0_22 = arith.constant 0 : index
      %c0_23 = arith.constant 0 : index
      %40 = vector.load %arg6[%c0_22, %c0_23] : memref<16x128xf32, #tpu.memory_space<vmem>>, vector<16x128xf32>
      %41 = vector.shape_cast %40 : vector<16x128xf32> to vector<1x16x128xf32>
      %cst_24 = arith.constant dense<0.000000e+00> : vector<1xf32>
      %42 = vector.multi_reduction <add>, %41, %cst_24 [1, 2] : vector<1x16x128xf32> to vector<1xf32>
      %43 = vector.shape_cast %42 : vector<1xf32> to vector<1x1x1xf32>
      %44 = vector.extract %43[0, 0, 0] : f32 from vector<1x1x1xf32>
      %c0_25 = arith.constant 0 : index
      %c1 = arith.constant 1 : index
      %45 = memref.load %arg4[%c0_25, %c1] : memref<1x2xf32, #tpu.memory_space<smem>>
      memref.store %44, %arg4[%c0_25, %c1] : memref<1x2xf32, #tpu.memory_space<smem>>
    } else {
    }
    return
  }
  func.func @transform_0(%arg0: i32, %arg1: i32) -> (i32, i32) {
    %c1_i32 = arith.constant 1 : i32
    %0 = arith.muli %arg0, %c1_i32 : i32
    %1 = arith.addi %0, %arg1 : i32
    %c0_i32 = arith.constant 0 : i32
    %c0_i32_0 = arith.constant 0 : i32
    return %1, %c0_i32 : i32, i32
  }
  func.func @transform_1(%arg0: i32, %arg1: i32) -> (i32, i32) {
    %c1_i32 = arith.constant 1 : i32
    %0 = arith.muli %arg0, %c1_i32 : i32
    %1 = arith.addi %0, %arg1 : i32
    %c0_i32 = arith.constant 0 : i32
    %c0_i32_0 = arith.constant 0 : i32
    return %1, %c0_i32 : i32, i32
  }
  func.func @transform_2(%arg0: i32, %arg1: i32) -> (i32, i32) {
    %c0_i32 = arith.constant 0 : i32
    %c0_i32_0 = arith.constant 0 : i32
    return %arg0, %c0_i32 : i32, i32
  }
}

</mosaic_0001>

<llo_original>
// kernel: tpu_custom_call.1
$region0: #{tpu_custom_call.1}
  #allocation0 [shape = 'u32[]', space=smem, size = 0x4, offset = 0x4, fixed_abs, tag = 'smem constant byte address 0x4 - core index']
  #allocation1 [shape = 'u32[144,128]{1,0:T(1,128)}', space=vmem, size = 0x12000, scoped, tag = 'internal scratch']
  #allocation2 [shape = 'f32[16,128]{1,0:T(8,128)}', space=vmem, size = 0x2000, scoped, tag = 'scratch operand']
  #allocation3 [shape = 'f32[16,128]{1,0:T(8,128)}', space=vmem, size = 0x2000, scoped, tag = 'scratch operand']
  %s0 = inlined_call_operand.hbm [shape: f32[16,128], index: 0, kind: input, shape index: {}]
  %s1 = inlined_call_operand.hbm [shape: f32[16,128], index: 1, kind: input, shape index: {}]
  %s2 = inlined_call_operand.hbm [shape: f32[1,2], index: 2, kind: output, shape index: {}]
  %s3 = sld [smem:[#allocation0]]
  $region34: #{tpu_custom_call.1} parent=0
    _
  %s5 = ssub.s32 1, %s3
  %s6 = scalar_select 0, %s5, %s3
  $region1: #{tpu_custom_call.1} parent=0
    #allocation4 [shape = 'u8[8192]{0}', space=vmem, size = 0x2000, scoped, tag = 'input window, operand 0, single buffered']
    #allocation5 [shape = 's32[1]{0}', space=sflag, size = 0x4, scoped, tag = 'scoped memory for tpu_custom_call.1']
    #allocation6 [shape = 's32[1]{0}', space=sflag, size = 0x4, scoped, tag = 'scoped memory for tpu_custom_call.1']
    #allocation7 [shape = 'u8[8192]{0}', space=vmem, size = 0x2000, scoped, tag = 'input window, operand 1, single buffered']
    #allocation8 [shape = 's32[1]{0}', space=sflag, size = 0x4, scoped, tag = 'scoped memory for tpu_custom_call.1']
    #allocation9 [shape = 'u8[512]{0}', space=smem, size = 0x200, scoped, tag = 'output window, operand 0, single buffered']
    %7 = vsyncpa [#allocation5], 0
    %8 = vsyncpa [#allocation8], 0
    %9 = vsyncpa [#allocation6], 0
    // Predicated region
    $region2: #{tpu_custom_call.1} parent=1 // pred_check
      _
    $region3: #{tpu_custom_call.1} parent=1 // pred_check_branch
      %11 = sbr.rel (0) target = $region5
    $region4: #{tpu_custom_call.1} parent=1 // pred_region
      %s12 = sadd.s32 0, 0
      %s13 = smul.u32 2, %s12
      %s15 = ssub.s32 256, 256
      %16 = vsyncadd [#allocation5], %s15
      %s17 = smul.addr %s13, 128
      %s18 = scalar_lea.hbm %s0, %s17
      %s19 = sshll.u32 [#allocation4], 4
      %s20 = int_to_ptr.vmem [resolvable:$true] %s19
      %25 = dma.hbm_to_vmem [thread:$0]  %s18, 256, %s20, [#allocation5], 128, 128, 8
    $region5: #{tpu_custom_call.1} parent=1 // pred_fallthru
      _
    // Predicated region
    $region6: #{tpu_custom_call.1} parent=1 // pred_check
      _
    $region7: #{tpu_custom_call.1} parent=1 // pred_check_branch
      %27 = sbr.rel (0) target = $region9
    $region8: #{tpu_custom_call.1} parent=1 // pred_region
      %s28 = sadd.s32 0, 0
      %s29 = smul.u32 2, %s28
      %s31 = ssub.s32 256, 256
      %32 = vsyncadd [#allocation8], %s31
      %s33 = smul.addr %s29, 128
      %s34 = scalar_lea.hbm %s1, %s33
      %s35 = sshll.u32 [#allocation7], 4
      %s36 = int_to_ptr.vmem [resolvable:$true] %s35
      %41 = dma.hbm_to_vmem [thread:$0]  %s34, 256, %s36, [#allocation8], 128, 128, 8
    $region9: #{tpu_custom_call.1} parent=1 // pred_fallthru
      _
    // Predicated region
    $region10: #{tpu_custom_call.1} parent=1 // pred_check
      _
    $region11: #{tpu_custom_call.1} parent=1 // pred_check_branch
      %43 = sbr.rel (0) target = $region13
    $region12: #{tpu_custom_call.1} parent=1 // pred_region
      %44 = dma.done [#allocation5], 256
    $region13: #{tpu_custom_call.1} parent=1 // pred_fallthru
      _
    // Predicated region
    $region14: #{tpu_custom_call.1} parent=1 // pred_check
      _
    $region15: #{tpu_custom_call.1} parent=1 // pred_check_branch
      %46 = sbr.rel (0) target = $region17
    $region16: #{tpu_custom_call.1} parent=1 // pred_region
      %47 = dma.done [#allocation8], 256
    $region17: #{tpu_custom_call.1} parent=1 // pred_fallthru
      _
    %s48 = sadd.s32 0, 0
    %s49 = smul.u32 2, %s48
    %s50 = sadd.s32 0, 0
    %s51 = smul.u32 2, %s50
    %p52 = scmp.eq.s32.totalorder 0, 0
    // Predicated region
    $region18: #{tpu_custom_call.1} parent=1 // pred_check
      %p53 = pneg %p52
    $region19: #{tpu_custom_call.1} parent=1 // pred_check_branch
      %55 = sbr.rel (%p53) target = $region21
    $region20: #{tpu_custom_call.1} parent=1 // pred_region
      %56 = vst [vmem:[#allocation2] sm:$0xff] 0.0
      %57 = vst [vmem:[#allocation2 + $0x8] sm:$0xff] 0.0
      %58 = vst [vmem:[#allocation3] sm:$0xff] 0.0
      %59 = vst [vmem:[#allocation3 + $0x8] sm:$0xff] 0.0
    $region21: #{tpu_custom_call.1} parent=1 // pred_fallthru
      _
    %v60 = vld [vmem:[#allocation7] sm:$0xff]
    %v61 = vld [vmem:[#allocation7 + $0x8] sm:$0xff]
    %v62 = vld [vmem:[#allocation4] sm:$0xff]
    %v63 = vld [vmem:[#allocation4 + $0x8] sm:$0xff]
    %s64 = sadd.s32 0, 0
    %v65 = vlaneseq
    %v66 = vshrl.u32 %v65, 7
    %v67 = vadd.s32 %v66, 8
    %s68 = smul.u32 %s64, 16
    %v69 = vstv %s68
    %v70 = vadd.s32 %v69, %v66
    %v71 = vadd.s32 %v69, %v67
    %vm72 = vcmp.lt.s32.totalorder %v70, 16
    %vm73 = vcmp.lt.s32.totalorder %v71, 16
    %vm74 = vcmp.gt.f32.partialorder %v60, 0.0
    %vm75 = vcmp.gt.f32.partialorder %v61, 0.0
    %vm76 = vcmp.lt.f32.partialorder %v60, 1.0
    %vm77 = vcmp.lt.f32.partialorder %v61, 1.0
    %vm78 = vmand %vm74, %vm76
    %vm79 = vmand %vm75, %vm77
    %vm80 = vmand %vm78, %vm72
    %vm81 = vmand %vm79, %vm73
    %v82 = vsub.f32 %v62, %v60
    %v83 = vsub.f32 %v63, %v61
    %v84 = vand.u32 2147483647, %v82
    %v85 = vand.u32 2147483647, %v83
    %v86 = vsel %vm80, %v84, 0.0
    %v87 = vsel %vm81, %v85, 0.0
    %v88 = vld [vmem:[#allocation2] sm:$0xff]
    %v89 = vld [vmem:[#allocation2 + $0x8] sm:$0xff]
    %v90 = vadd.f32 %v88, %v86
    %v91 = vadd.f32 %v89, %v87
    %92 = vst [vmem:[#allocation2] sm:$0xff] %v90
    %93 = vst [vmem:[#allocation2 + $0x8] sm:$0xff] %v91
    %v94 = vld [vmem:[#allocation3] sm:$0xff]
    %v95 = vld [vmem:[#allocation3 + $0x8] sm:$0xff]
    %v96 = vsel %vm80, 1, 0
    %v97 = vsel %vm81, 1, 0
    %v98 = vcvt.s32.f32 %v96
    %v99 = vcvt.s32.f32 %v97
    %v100 = vadd.f32 %v94, %v98
    %v101 = vadd.f32 %v95, %v99
    %102 = vst [vmem:[#allocation3] sm:$0xff] %v100
    %103 = vst [vmem:[#allocation3 + $0x8] sm:$0xff] %v101
    // Predicated region
    $region22: #{tpu_custom_call.1} parent=1 // pred_check
      %p104 = pneg %p52
    $region23: #{tpu_custom_call.1} parent=1 // pred_check_branch
      %106 = sbr.rel (%p104) target = $region25
    $region24: #{tpu_custom_call.1} parent=1 // pred_region
      %v107 = vld [vmem:[#allocation2] sm:$0xff]
      %v108 = vld [vmem:[#allocation2 + $0x8] sm:$0xff]
      %v109 = vadd.f32 %v107, %v108
      %110 = vadd.xlane.f32.xlu0 %v109
      %v111 = vpop.xlane.xlu0 %110
      %v112 = vrot.slane %v111, 4
      %v113 = vadd.f32 %v111, %v112
      %v114 = vrot.slane %v113, 2
      %v115 = vadd.f32 %v113, %v114
      %v116 = vrot.slane %v115, 1
      %v117 = vadd.f32 %v115, %v116
      %s118 = vtos %v117
      %s119 = scalar_lea.smem [#allocation9], 0
      %120 = sst [smem:[%s119]] %s118
      %v121 = vld [vmem:[#allocation3] sm:$0xff]
      %v122 = vld [vmem:[#allocation3 + $0x8] sm:$0xff]
      %v123 = vadd.f32 %v121, %v122
      %124 = vadd.xlane.f32.xlu0 %v123
      %v125 = vpop.xlane.xlu0 %124
      %v126 = vrot.slane %v125, 4
      %v127 = vadd.f32 %v125, %v126
      %v128 = vrot.slane %v127, 2
      %v129 = vadd.f32 %v127, %v128
      %v130 = vrot.slane %v129, 1
      %v131 = vadd.f32 %v129, %v130
      %s132 = vtos %v131
      %s133 = scalar_lea.smem [#allocation9], 1
      %134 = sst [smem:[%s133]] %s132
    $region25: #{tpu_custom_call.1} parent=1 // pred_fallthru
      _
    // Predicated region
    $region26: #{tpu_custom_call.1} parent=1 // pred_check
      _
    $region27: #{tpu_custom_call.1} parent=1 // pred_check_branch
      %136 = sbr.rel (0) target = $region29
    $region28: #{tpu_custom_call.1} parent=1 // pred_region
      %s138 = ssub.s32 16, 16
      %139 = vsyncadd [#allocation6], %s138
      %142 = dma.smem_to_hbm [#allocation9], 16, %s2, [#allocation6]
    $region29: #{tpu_custom_call.1} parent=1 // pred_fallthru
      _
    // Predicated region
    $region30: #{tpu_custom_call.1} parent=1 // pred_check
      _
    $region31: #{tpu_custom_call.1} parent=1 // pred_check_branch
      %144 = sbr.rel (0) target = $region33
    $region32: #{tpu_custom_call.1} parent=1 // pred_region
      %145 = dma.done [#allocation6], 16
    $region33: #{tpu_custom_call.1} parent=1 // pred_fallthru
      _
    %146 = sfence
    %147 = vsyncpa [#allocation5], 1
    %148 = vsyncpa [#allocation8], 1
    %149 = vsyncpa [#allocation6], 1

</llo_original>
